<compile_context>
chip_gen: v5e
topology: v5e:2x2
jax: 0.10.0
libtpu: 0.0.40
codegen_flags: <defaults>
</compile_context>

<pallas_src>
import functools

import jax
import jax.numpy as jnp
import numpy as np
from jax.experimental import pallas as pl
from jax.experimental.pallas import tpu as pltpu


# ----------------------------- model constants ---------------------------- #

H0 = 18            # spatial size implied by the module (convw == convh == 6)
W0 = 18
NFC = 128          # channel width of every conv layer
FRAME = H0 * W0    # 324 rows per (batch, time) slice
ROWS = ((FRAME + 7) // 8) * 8   # 328, padded to a sublane multiple

K1 = 5             # conv1 / conv2 kernel size
K3 = 3             # conv3 / conv4 kernel size

# row offsets (into the flattened H0 x W0 frame) of each conv tap
_TAPS5 = tuple(kh * W0 + kw for kh in range(K1) for kw in range(K1))
_TAPS3 = tuple(kh * W0 + kw for kh in range(K3) for kw in range(K3))


# ------------------------ pltpu.roll convention probe ---------------------- #

def _roll_probe_kernel(x_ref, o_ref):
    o_ref[...] = pltpu.roll(x_ref[...], shift=5, axis=0)


def probe_roll_is_jnp_like():
    """True iff pltpu.roll(x, s, 0)[i] == x[(i - s) % n] (jnp.roll convention)."""
    x = jnp.broadcast_to(jnp.arange(16, dtype=jnp.float32)[:, None], (16, 128))
    y = pl.pallas_call(
        _roll_probe_kernel,
        out_shape=jax.ShapeDtypeStruct((16, 128), jnp.float32),
        in_specs=[pl.BlockSpec(memory_space=pltpu.MemorySpace.VMEM)],
        out_specs=pl.BlockSpec(memory_space=pltpu.MemorySpace.VMEM),
    )(x)
    v = float(np.asarray(y)[0, 0])
    if v == 11.0:          # y[0] = x[(0 - 5) % 16] = x[11]
        return True
    if v == 5.0:           # y[0] = x[(0 + 5) % 16] = x[5]
        return False
    raise RuntimeError(f"unexpected pltpu.roll behaviour (probe got {v})")


# ---------------------------- fused conv kernel ---------------------------- #

def _fused_conv_kernel(p1_ref, w1_ref, b1_ref, w2_ref, b2_ref, w3_ref, b3_ref,
                       w4_ref, b4_ref, o_ref, *, roll_like_jnp):
    rows = o_ref.shape[1]

    def shift(v, d):
        # shifted[r] = v[(r + d) % rows]; wrap-around only hits invalid rows.
        if d == 0:
            return v
        s = (rows - d) if roll_like_jnp else d
        return pltpu.roll(v, shift=s, axis=0)

    def conv_taps(x, w_ref, b_ref, taps):
        acc = None
        for t, d in enumerate(taps):
            contrib = jnp.dot(shift(x, d), w_ref[t],
                              preferred_element_type=jnp.float32)
            acc = contrib if acc is None else acc + contrib
        return jnp.maximum(acc + b_ref[...], 0.0)

    # conv1 (Cin == 1): pre-built patch columns, one dense matmul (K padded to 128).
    x = jnp.dot(p1_ref[0], w1_ref[...], preferred_element_type=jnp.float32)
    x = jnp.maximum(x + b1_ref[...], 0.0)
    # conv2..conv4: shifted-matmul tap accumulation, fully VMEM-resident.
    x = conv_taps(x, w2_ref, b2_ref, _TAPS5)
    x = conv_taps(x, w3_ref, b3_ref, _TAPS3)
    x = conv_taps(x, w4_ref, b4_ref, _TAPS3)
    o_ref[0] = x


def fused_conv_forward(p1, kp, *, roll_like_jnp):
    B = p1.shape[0]

    def res_spec(shape):   # weight / bias resident across the whole grid
        return pl.BlockSpec(shape, lambda b: (0,) * len(shape))

    return pl.pallas_call(
        functools.partial(_fused_conv_kernel, roll_like_jnp=roll_like_jnp),
        out_shape=jax.ShapeDtypeStruct((B, ROWS, NFC), jnp.float32),
        grid=(B,),
        in_specs=[
            pl.BlockSpec((1, ROWS, 128), lambda b: (b, 0, 0)),   # conv1 patches
            res_spec((128, NFC)),                                # conv1 weight (padded K)
            res_spec((1, NFC)),                                  # conv1 bias
            res_spec((K1 * K1, NFC, NFC)),                       # conv2 taps
            res_spec((1, NFC)),
            res_spec((K3 * K3, NFC, NFC)),                       # conv3 taps
            res_spec((1, NFC)),
            res_spec((K3 * K3, NFC, NFC)),                       # conv4 taps
            res_spec((1, NFC)),
        ],
        out_specs=pl.BlockSpec((1, ROWS, NFC), lambda b: (b, 0, 0)),
        compiler_params=pltpu.CompilerParams(
            dimension_semantics=("parallel",)),                  # v7x megacore
    )(p1, kp['w1'], kp['b1'], kp['w2'], kp['b2'],
      kp['w3'], kp['b3'], kp['w4'], kp['b4'])


# -------------------------------- head kernel ------------------------------ #

def _head_kernel(x_ref, w_ref, b_ref, o_ref):
    o_ref[...] = (jnp.dot(x_ref[...], w_ref[...],
                          preferred_element_type=jnp.float32) + b_ref[...])


def head_forward(feat, w, b):
    M = feat.shape[0]
    return pl.pallas_call(
        _head_kernel,
        out_shape=jax.ShapeDtypeStruct((M, w.shape[1]), jnp.float32),
        in_specs=[pl.BlockSpec(memory_space=pltpu.MemorySpace.VMEM)] * 3,
        out_specs=pl.BlockSpec(memory_space=pltpu.MemorySpace.VMEM),
    )(feat, w, b)


# ------------------------------ full forward ------------------------------- #

def dqn_forward_pallas(x, kp, *, n_outputs, roll_like_jnp):
    # x: (N, 1, T, 18, 18) float32, same NCDHW convention as the PyTorch module.
    N, Cin, T, H, W = x.shape
    assert Cin == 1 and H == H0 and W == W0
    B = N * T

    # conv1 patch columns (Cin == 1): tap (kh, kw) -> image shifted by (kh, kw),
    # zero padded at the borders (only the valid region is ever consumed).
    img = x[:, 0].reshape(B, H0, W0)
    imgp = jnp.pad(img, ((0, 0), (0, K1 - 1), (0, K1 - 1)))
    cols = [imgp[:, kh:kh + H0, kw:kw + W0].reshape(B, FRAME)
            for kh in range(K1) for kw in range(K1)]
    p1 = jnp.stack(cols, axis=-1)                                   # (B, 324, 25)
    p1 = jnp.pad(p1, ((0, 0), (0, ROWS - FRAME), (0, 128 - K1 * K1)))

    y = fused_conv_forward(p1, kp, roll_like_jnp=roll_like_jnp)     # (B, 328, 128)

    # valid 6x6 region, flattened channel-last (t, h, w, c); the matching row
    # permutation of the head weight was applied once in convert_params.
    y = y[:, :FRAME, :].reshape(B, H0, W0, NFC)[:, :6, :6, :]
    feat = y.reshape(N, T * 6 * 6 * NFC)

    out = head_forward(feat, kp['head_w'], kp['head_b'])            # (N, 128) lane-dense
    return out[:, :n_outputs]


# ----------------- parameter init (torch layout) & conversion --------------- #

def init_params(key, time_window, outputs):
    nfc = 128
    conv_shapes = {
        'conv1': (128, 1, 1, 5, 5),
        'conv2': (128, 128, 1, 5, 5),
        'conv3': (128, 128, 1, 3, 3),
        'conv4': (nfc, 128, 1, 3, 3),
    }
    keys = jax.random.split(key, 2 * len(conv_shapes) + 2)
    params = {}
    for i, (name, s) in enumerate(conv_shapes.items()):
        fan_in = s[1] * s[2] * s[3] * s[4]
        params[name + '_w'] = (
            jax.random.normal(keys[2 * i], s, jnp.float32) / np.sqrt(fan_in))
        params[name + '_b'] = (
            jax.random.normal(keys[2 * i + 1], (s[0],), jnp.float32) * 0.01)
    lin_in = 6 * 6 * time_window * nfc
    params['head_w'] = (
        jax.random.normal(keys[-2], (outputs, lin_in), jnp.float32) / np.sqrt(lin_in))
    params['head_b'] = jax.random.normal(keys[-1], (outputs,), jnp.float32) * 0.01
    return params


def convert_params(params, time_window, outputs):
    """One-time conversion: torch-layout params -> kernel-layout params."""
    def conv_taps(w):   # (Cout, Cin, 1, KH, KW) -> (KH*KW, Cin, Cout)
        kh, kw = w.shape[3], w.shape[4]
        return jnp.transpose(w[:, :, 0, :, :], (2, 3, 1, 0)).reshape(
            kh * kw, w.shape[1], w.shape[0])

    kp = {}
    w1 = conv_taps(params['conv1_w'])[:, 0, :]                       # (25, 128)
    kp['w1'] = jnp.pad(w1, ((0, 128 - w1.shape[0]), (0, 0)))         # zero-padded K
    kp['b1'] = params['conv1_b'].reshape(1, NFC)
    kp['w2'] = conv_taps(params['conv2_w'])
    kp['b2'] = params['conv2_b'].reshape(1, NFC)
    kp['w3'] = conv_taps(params['conv3_w'])
    kp['b3'] = params['conv3_b'].reshape(1, NFC)
    kp['w4'] = conv_taps(params['conv4_w'])
    kp['b4'] = params['conv4_b'].reshape(1, NFC)

    # head: torch flatten order is (c, t, h, w); kernel flatten is (t, h, w, c).
    # Permute rows once here and pad outputs 4 -> 128 so the kernel store is
    # lane dense.  No runtime transpose remains in the forward path.
    hw = params['head_w'].reshape(outputs, NFC, time_window, 6, 6)
    hw = jnp.transpose(hw, (2, 3, 4, 1, 0)).reshape(time_window * 36 * NFC, outputs)
    kp['head_w'] = jnp.pad(hw, ((0, 0), (0, 128 - outputs)))
    kp['head_b'] = jnp.pad(params['head_b'], (0, 128 - outputs)).reshape(1, 128)
    return kp


# ----------------------------- pure-JAX reference --------------------------- #

def dqn_forward_reference(x, params):
    def conv3d_relu(x, w, b):
        y = jax.lax.conv_general_dilated(
            x, w, window_strides=(1, 1, 1), padding='VALID',
            dimension_numbers=('NCDHW', 'OIDHW', 'NCDHW'),
            precision=jax.lax.Precision.HIGHEST)
        return jax.nn.relu(y + b.reshape(1, -1, 1, 1, 1))

    y = conv3d_relu(x, params['conv1_w'], params['conv1_b'])
    y = conv3d_relu(y, params['conv2_w'], params['conv2_b'])
    y = conv3d_relu(y, params['conv3_w'], params['conv3_b'])
    y = conv3d_relu(y, params['conv4_w'], params['conv4_b'])
    feat = y.reshape(y.shape[0], -1)
    return (jnp.dot(feat, params['head_w'].T,
                    precision=jax.lax.Precision.HIGHEST) + params['head_b'])


# ------------------------------------ main ---------------------------------- #

if __name__ == "__main__":
    N, time_window, outputs = 2, 2, 4     # H = W = 18 -> convw = convh = 6
    key = jax.random.PRNGKey(0)
    pkey, xkey = jax.random.split(key)
    params = init_params(pkey, time_window, outputs)
    x = jax.random.normal(xkey, (N, 1, time_window, H0, W0), jnp.float32)

    roll_like_jnp = probe_roll_is_jnp_like()
    kp = convert_params(params, time_window, outputs)

    fwd = jax.jit(functools.partial(dqn_forward_pallas,
                                    n_outputs=outputs,
                                    roll_like_jnp=roll_like_jnp))
    out = jax.block_until_ready(fwd(x, kp))
    ref = jax.block_until_ready(dqn_forward_reference(x, params))

    assert out.shape == (N, outputs), out.shape
    np.testing.assert_allclose(np.asarray(out), np.asarray(ref),
                               rtol=2e-3, atol=2e-3)
    print("KERNEL_OK")
</pallas_src>

<mosaic_0001>
module attributes {stable_mosaic.version = 11 : i64} {
  func.func @_roll_probe_kernel(%arg0: memref<16x128xf32, #tpu.memory_space<vmem>>, %arg1: memref<16x128xf32, #tpu.memory_space<vmem>>) attributes {dimension_semantics = [], scalar_prefetch = 0 : i64, scratch_operands = 0 : i64, tpu.core_type = #tpu.core_type<tc>} {
    %c0 = arith.constant 0 : index
    %c0_0 = arith.constant 0 : index
    %0 = vector.load %arg0[%c0, %c0_0] : memref<16x128xf32, #tpu.memory_space<vmem>>, vector<16x128xf32>
    %c5_i32 = arith.constant 5 : i32
    %1 = tpu.dynamic_rotate %0 by %c5_i32 dim 0 : vector<16x128xf32>, i32 -> vector<16x128xf32>
    %c0_1 = arith.constant 0 : index
    %c0_2 = arith.constant 0 : index
    %2 = vector.load %arg1[%c0_1, %c0_2] : memref<16x128xf32, #tpu.memory_space<vmem>>, vector<16x128xf32>
    tpu.vector_store %arg1[%c0_1, %c0_2], %1 {strides = array<i32>} : memref<16x128xf32, #tpu.memory_space<vmem>>, vector<16x128xf32>,
    return
  }
}

</mosaic_0001>

<llo_original>
// kernel: tpu_custom_call.1
$region0: #{tpu_custom_call.1}
  #allocation0 [shape = 'u32[]', space=smem, size = 0x4, offset = 0x4, fixed_abs, tag = 'smem constant byte address 0x4 - core index']
  #allocation1 [shape = 'u32[72,128]{1,0:T(1,128)}', space=vmem, size = 0x9000, scoped, tag = 'internal scratch']
  %s0 = inlined_call_operand.hbm [shape: f32[16,128], index: 0, kind: input, shape index: {}]
  %s1 = inlined_call_operand.hbm [shape: f32[16,128], index: 1, kind: output, shape index: {}]
  %s2 = sld [smem:[#allocation0]]
  $region18: #{tpu_custom_call.1} parent=0
    _
  %s4 = ssub.s32 1, %s2
  %s5 = scalar_select 0, %s4, %s2
  $region1: #{tpu_custom_call.1} parent=0
    #allocation2 [shape = 'u8[8192]{0}', space=vmem, size = 0x2000, scoped, tag = 'input window, operand 0, single buffered']
    #allocation3 [shape = 's32[1]{0}', space=sflag, size = 0x4, scoped, tag = 'scoped memory for tpu_custom_call.1']
    #allocation4 [shape = 's32[1]{0}', space=sflag, size = 0x4, scoped, tag = 'scoped memory for tpu_custom_call.1']
    #allocation5 [shape = 'u8[8192]{0}', space=vmem, size = 0x2000, scoped, tag = 'output window, operand 0, single buffered']
    %6 = vsyncpa [#allocation3], 0
    %7 = vsyncpa [#allocation4], 0
    // Predicated region
    $region2: #{tpu_custom_call.1} parent=1 // pred_check
      _
    $region3: #{tpu_custom_call.1} parent=1 // pred_check_branch
      %9 = sbr.rel (0) target = $region5
    $region4: #{tpu_custom_call.1} parent=1 // pred_region
      %11 = vsyncadd [#allocation3], 0
      %s12 = sshll.u32 %s0, 4
      %s13 = int_to_ptr.hbm [resolvable:$true] %s12
      %s14 = sshll.u32 [#allocation2], 4
      %s15 = int_to_ptr.vmem [resolvable:$true] %s14
      %20 = dma.hbm_to_vmem [thread:$0]  %s13, 256, %s15, [#allocation3], 128, 128, 8
    $region5: #{tpu_custom_call.1} parent=1 // pred_fallthru
      _
    // Predicated region
    $region6: #{tpu_custom_call.1} parent=1 // pred_check
      _
    $region7: #{tpu_custom_call.1} parent=1 // pred_check_branch
      %22 = sbr.rel (0) target = $region9
    $region8: #{tpu_custom_call.1} parent=1 // pred_region
      %24 = dma.done [#allocation3], 256
    $region9: #{tpu_custom_call.1} parent=1 // pred_fallthru
      _
    %v25 = vld [vmem:[#allocation2] sm:$0xff]
    %v26 = vld [vmem:[#allocation2 + $0x8] sm:$0xff]
    %v27 = vrot.slane %v25, 3
    %v28 = vrot.slane %v26, 3
    %v29 = vlaneseq
    %v30 = vshrl.u32 %v29, 7
    %vm31 = vcmp.lt.s32.totalorder %v30, 5
    %v32 = vsel %vm31, %v27, %v28
    %v33 = vsel %vm31, %v28, %v27
    %34 = vst [vmem:[#allocation5] sm:$0xff] %v33
    %35 = vst [vmem:[#allocation5 + $0x8] sm:$0xff] %v32
    // Predicated region
    $region10: #{tpu_custom_call.1} parent=1 // pred_check
      _
    $region11: #{tpu_custom_call.1} parent=1 // pred_check_branch
      %37 = sbr.rel (0) target = $region13
    $region12: #{tpu_custom_call.1} parent=1 // pred_region
      %39 = vsyncadd [#allocation4], 0
      %s40 = sshll.u32 [#allocation5], 4
      %s41 = int_to_ptr.vmem [resolvable:$true] %s40
      %s42 = sshll.u32 %s1, 4
      %s43 = int_to_ptr.hbm [resolvable:$true] %s42
      %48 = dma.vmem_to_hbm [thread:$0]  %s41, 256, %s43, [#allocation4], 128, 128, 8
    $region13: #{tpu_custom_call.1} parent=1 // pred_fallthru
      _
    // Predicated region
    $region14: #{tpu_custom_call.1} parent=1 // pred_check
      _
    $region15: #{tpu_custom_call.1} parent=1 // pred_check_branch
      %50 = sbr.rel (0) target = $region17
    $region16: #{tpu_custom_call.1} parent=1 // pred_region
      %52 = dma.done [#allocation4], 256
    $region17: #{tpu_custom_call.1} parent=1 // pred_fallthru
      _
    %53 = vsyncpa [#allocation3], 1
    %54 = vsyncpa [#allocation4], 1

</llo_original>
